<compile_context>
chip_gen: v6e
topology: v6e:2x2x1
jax: 0.10.0
libtpu: 0.0.40
codegen_flags: <defaults>
</compile_context>

<pallas_src>
import jax
import jax.numpy as jnp
from jax.experimental import pallas as pl
from jax.experimental.pallas import tpu as pltpu


def env_context_kernel(idx_ref, emb_ref, w_ref, out_ref, ctx_ref):
    # idx_ref : VMEM (TB, 1)  int32   -- td['current_node'] for this batch tile
    # emb_ref : VMEM (TB, N, D)       -- node embeddings for this batch tile
    # w_ref   : VMEM (2D, D)          -- project_context.weight.T (resident)
    # out_ref : VMEM (TB, D)          -- projected context embedding
    # ctx_ref : VMEM (TB, 2D) scratch -- [cur ; state], fed to one fused dot
    tb, n, d = emb_ref.shape

    emb = emb_ref[...]                                        # (TB, N, D)
    idx = idx_ref[...]                                        # (TB, 1) int32

    # gather_by_index(embeddings, current_node): one-hot masked reduction over
    # the node axis (exact select, works for any dtype; no dynamic slicing).
    node_ids = jax.lax.broadcasted_iota(jnp.int32, (tb, n, d), 1)
    sel = node_ids == idx[:, :, None]                         # (TB, N, D) bool
    cur = jnp.sum(jnp.where(sel, emb, jnp.zeros((), emb.dtype)), axis=1)

    # _state_embedding: mean over nodes, accumulated in f32.
    state = jnp.mean(emb.astype(jnp.float32), axis=1)         # (TB, D) f32

    # project_context(cat([cur, state], -1)) as a single (TB,2D)@(2D,D) dot.
    ctx_ref[:, 0:d] = cur.astype(ctx_ref.dtype)
    ctx_ref[:, d:2 * d] = state.astype(ctx_ref.dtype)
    proj = jnp.dot(ctx_ref[...], w_ref[...],
                   preferred_element_type=jnp.float32)        # (TB, D) f32
    out_ref[...] = proj.astype(out_ref.dtype)


def env_context_forward(embeddings, current_node, w_t, *, tile_b=None,
                        vmem_budget_bytes=16 * 1024 * 1024):
    """EnvContext.forward.

    embeddings  : (B, N, D)
    current_node: (B,) integer
    w_t         : (2D, D) = project_context.weight.T  (linear_bias=False)
    returns     : (B, D)
    """
    B, N, D = embeddings.shape
    assert w_t.shape == (2 * D, D)

    # Batch tile: multiple of 8 (sublane), capped so the double-buffered
    # embeddings tile fits in scoped VMEM (re-derived per shape; v7x-safe).
    if tile_b is None:
        row_bytes = N * D * embeddings.dtype.itemsize
        fit = max(8, (vmem_budget_bytes // (2 * row_bytes)) // 8 * 8)
        tile_b = int(min(128, fit))
    tile_b = max(8, (int(tile_b) // 8) * 8)
    tile_b = min(tile_b, ((B + 7) // 8) * 8)   # don't over-pad tiny batches

    B_pad = ((B + tile_b - 1) // tile_b) * tile_b
    if B_pad != B:
        embeddings = jnp.pad(embeddings, ((0, B_pad - B), (0, 0), (0, 0)))
        current_node = jnp.pad(current_node, (0, B_pad - B))
    idx2d = current_node.astype(jnp.int32).reshape(B_pad, 1)

    grid_spec = pltpu.PrefetchScalarGridSpec(
        num_scalar_prefetch=0,
        grid=(B_pad // tile_b,),
        in_specs=[
            pl.BlockSpec((tile_b, 1), lambda i: (i, 0)),
            pl.BlockSpec((tile_b, N, D), lambda i: (i, 0, 0)),
            # Constant index_map -> weight stays resident, no re-DMA per step.
            pl.BlockSpec((2 * D, D), lambda i: (0, 0)),
        ],
        out_specs=pl.BlockSpec((tile_b, D), lambda i: (i, 0)),
        scratch_shapes=[pltpu.VMEM((tile_b, 2 * D), embeddings.dtype)],
    )

    out = pl.pallas_call(
        env_context_kernel,
        out_shape=jax.ShapeDtypeStruct((B_pad, D), embeddings.dtype),
        grid_spec=grid_spec,
        compiler_params=pltpu.CompilerParams(
            dimension_semantics=("parallel",)),
    )(idx2d, embeddings, w_t)
    return out[:B]


if __name__ == "__main__":
    key = jax.random.PRNGKey(0)
    B, N, D = 10, 8, 32           # batch, num_nodes (seq), embed_dim
    step_context_dim = 2 * D      # [cur_node_embedding ; state_embedding]

    k_emb, k_w, k_idx = jax.random.split(key, 3)
    embeddings = jax.random.normal(k_emb, (B, N, D), dtype=jnp.float32)
    # nn.Linear(step_context_dim, embed_dim, bias=False): weight shape (D, 2D)
    weight = (jax.random.normal(k_w, (D, step_context_dim), dtype=jnp.float32)
              * (1.0 / jnp.sqrt(step_context_dim)))
    w_t = weight.T                                     # (2D, D), y = ctx @ W.T
    current_node = jax.random.randint(k_idx, (B,), 0, N, dtype=jnp.int32)

    # tile_b=8 exercises both the multi-step grid (B_pad=16 -> 2 steps) and
    # the batch-padding path (B=10 is not a multiple of 8).
    out = env_context_forward(embeddings, current_node, w_t, tile_b=8)
    jax.block_until_ready(out)

    # pure-JAX reference (gather + mean + cat + linear)
    cur_ref = embeddings[jnp.arange(B), current_node]          # (B, D)
    state_ref = embeddings.mean(axis=1)                        # (B, D)
    ctx_ref = jnp.concatenate([cur_ref, state_ref], axis=-1)   # (B, 2D)
    ref = ctx_ref @ w_t                                        # (B, D)
    assert out.shape == (B, D)
    assert jnp.allclose(out, ref, rtol=1e-4, atol=1e-4), float(
        jnp.max(jnp.abs(out - ref)))

    print("KERNEL_OK")
</pallas_src>

<mosaic_0001>
module attributes {stable_mosaic.version = 11 : i64} {
  func.func @env_context_kernel(%arg0: i32, %arg1: memref<8x1xi32, #tpu.memory_space<vmem>>, %arg2: memref<8x8x32xf32, #tpu.memory_space<vmem>>, %arg3: memref<64x32xf32, #tpu.memory_space<vmem>>, %arg4: memref<8x32xf32, #tpu.memory_space<vmem>>, %arg5: memref<8x64xf32, #tpu.memory_space<vmem>>) attributes {dimension_semantics = [#tpu.dimension_semantics<parallel>], iteration_bounds = array<i64: 2>, scalar_prefetch = 0 : i64, scratch_operands = 1 : i64, tpu.core_type = #tpu.core_type<tc>, window_params = [{transform_indices = @transform_0, window_bounds = array<i64: 8, 1>}, {transform_indices = @transform_1, window_bounds = array<i64: 8, 8, 32>}, {pipeline_mode = #tpu.pipeline_mode<synchronous>, transform_indices = @transform_2, window_bounds = array<i64: 64, 32>}, {transform_indices = @transform_3, window_bounds = array<i64: 8, 32>}]} {
    %c0 = arith.constant 0 : index
    %c0_0 = arith.constant 0 : index
    %c0_1 = arith.constant 0 : index
    %0 = vector.load %arg2[%c0, %c0_0, %c0_1] : memref<8x8x32xf32, #tpu.memory_space<vmem>>, vector<8x8x32xf32>
    %c0_2 = arith.constant 0 : index
    %c0_3 = arith.constant 0 : index
    %1 = vector.load %arg1[%c0_2, %c0_3] : memref<8x1xi32, #tpu.memory_space<vmem>>, vector<8x1xi32>
    %2 = tpu.iota {dimensions = array<i32: 1>} : vector<8x8x32xi32>
    %3 = vector.shape_cast %1 : vector<8x1xi32> to vector<8x1x1xi32>
    %4 = vector.broadcast %3 : vector<8x1x1xi32> to vector<8x8x32xi32>
    %5 = arith.cmpi eq, %2, %4 : vector<8x8x32xi32>
    %cst = arith.constant 0.000000e+00 : f32
    %6 = vector.broadcast %cst : f32 to vector<8x8x32xf32>
    %7 = arith.select %5, %0, %6 : vector<8x8x32xi1>, vector<8x8x32xf32>
    %cst_4 = arith.constant dense<0.000000e+00> : vector<8x32xf32>
    %8 = vector.multi_reduction <add>, %7, %cst_4 [1] : vector<8x8x32xf32> to vector<8x32xf32>
    %cst_5 = arith.constant dense<0.000000e+00> : vector<8x32xf32>
    %9 = vector.multi_reduction <add>, %0, %cst_5 [1] : vector<8x8x32xf32> to vector<8x32xf32>
    %cst_6 = arith.constant 8.000000e+00 : f32
    %10 = vector.broadcast %cst_6 : f32 to vector<8x32xf32>
    %11 = arith.divf %9, %10 : vector<8x32xf32>
    %c0_7 = arith.constant 0 : index
    %c0_8 = arith.constant 0 : index
    %12 = vector.load %arg5[%c0_7, %c0_8] : memref<8x64xf32, #tpu.memory_space<vmem>>, vector<8x32xf32>
    tpu.vector_store %arg5[%c0_7, %c0_8], %8 {strides = array<i32>} : memref<8x64xf32, #tpu.memory_space<vmem>>, vector<8x32xf32>,
    %c0_9 = arith.constant 0 : index
    %c32 = arith.constant 32 : index
    %13 = vector.load %arg5[%c0_9, %c32] : memref<8x64xf32, #tpu.memory_space<vmem>>, vector<8x32xf32>
    tpu.vector_store %arg5[%c0_9, %c32], %11 {strides = array<i32>} : memref<8x64xf32, #tpu.memory_space<vmem>>, vector<8x32xf32>,
    %c0_10 = arith.constant 0 : index
    %c0_11 = arith.constant 0 : index
    %14 = vector.load %arg5[%c0_10, %c0_11] : memref<8x64xf32, #tpu.memory_space<vmem>>, vector<8x64xf32>
    %c0_12 = arith.constant 0 : index
    %c0_13 = arith.constant 0 : index
    %15 = vector.load %arg3[%c0_12, %c0_13] : memref<64x32xf32, #tpu.memory_space<vmem>>, vector<64x32xf32>
    %cst_14 = arith.constant dense<0.000000e+00> : vector<8x32xf32>
    %16 = tpu.matmul %14, %15, %cst_14 {dimension_numbers = #tpu.dot_dimension_numbers<[1], [0], [0], [1], [0, 0, 1, 1], [], []>} : vector<8x64xf32>, vector<64x32xf32>, vector<8x32xf32> -> vector<8x32xf32>
    %c0_15 = arith.constant 0 : index
    %c0_16 = arith.constant 0 : index
    %17 = vector.load %arg4[%c0_15, %c0_16] : memref<8x32xf32, #tpu.memory_space<vmem>>, vector<8x32xf32>
    tpu.vector_store %arg4[%c0_15, %c0_16], %16 {strides = array<i32>} : memref<8x32xf32, #tpu.memory_space<vmem>>, vector<8x32xf32>,
    return
  }
  func.func @transform_0(%arg0: i32) -> (i32, i32) {
    %c0_i32 = arith.constant 0 : i32
    %c0_i32_0 = arith.constant 0 : i32
    return %arg0, %c0_i32 : i32, i32
  }
  func.func @transform_1(%arg0: i32) -> (i32, i32, i32) {
    %c0_i32 = arith.constant 0 : i32
    %c0_i32_0 = arith.constant 0 : i32
    %c0_i32_1 = arith.constant 0 : i32
    return %arg0, %c0_i32, %c0_i32_0 : i32, i32, i32
  }
  func.func @transform_2(%arg0: i32) -> (i32, i32) {
    %c0_i32 = arith.constant 0 : i32
    %c0_i32_0 = arith.constant 0 : i32
    %c0_i32_1 = arith.constant 0 : i32
    return %c0_i32, %c0_i32_0 : i32, i32
  }
  func.func @transform_3(%arg0: i32) -> (i32, i32) {
    %c0_i32 = arith.constant 0 : i32
    %c0_i32_0 = arith.constant 0 : i32
    return %arg0, %c0_i32 : i32, i32
  }
}

</mosaic_0001>

<llo_original>
// kernel: tpu_custom_call.1
$region0: #{tpu_custom_call.1}
  #allocation0 [shape = 'u32[]', space=smem, size = 0x4, offset = 0x4, fixed_abs, tag = 'smem constant byte address 0x4 - core index']
  #allocation1 [shape = 'u32[144,128]{1,0:T(1,128)}', space=vmem, size = 0x12000, scoped, tag = 'internal scratch']
  #allocation2 [shape = 'f32[8,64]{1,0:T(8,128)}', space=vmem, size = 0x1000, scoped, tag = 'scratch operand']
  %s0 = inlined_call_operand.vmem [shape: s32[16,1], index: 0, kind: input, shape index: {}]
  %s1 = inlined_call_operand.hbm [shape: f32[16,8,32], index: 1, kind: input, shape index: {}]
  %s2 = inlined_call_operand.vmem [shape: f32[64,32], index: 2, kind: input, shape index: {}]
  %s3 = inlined_call_operand.hbm [shape: f32[16,32], index: 3, kind: output, shape index: {}]
  %s4 = sld [smem:[#allocation0]]
  $region49: #{tpu_custom_call.1} parent=0
    _
  %s6 = ssub.s32 1, %s4
  %s7 = scalar_select 0, %s6, %s4
  $region1: #{tpu_custom_call.1} parent=0
    #allocation3 [shape = 'u8[65536]{0}', space=vmem, size = 0x10000, scoped, tag = 'input window, operand 1']
    #allocation4 [shape = 's32[2]{0}', space=sflag, size = 0x8, scoped, tag = 'scoped memory for tpu_custom_call.1']
    #allocation5 [shape = 's32[2]{0}', space=sflag, size = 0x8, scoped, tag = 'scoped memory for tpu_custom_call.1']
    #allocation6 [shape = 'u8[8192]{0}', space=vmem, size = 0x2000, scoped, tag = 'output window, operand 0']
    %8 = vsyncpa [#allocation4], 0
    %s9 = scalar_lea.sflag [#allocation4], 1
    %10 = vsyncpa %s9, 0
    %11 = vsyncpa [#allocation5], 0
    %s12 = scalar_lea.sflag [#allocation5], 1
    %13 = vsyncpa %s12, 0
    loop: start=0, step=1, limit=4
    $region2: #{tpu_custom_call.1} parent=1 // loop_pre_header
      _
    $region3: #{tpu_custom_call.1} parent=1 // loop_header
      %s15 = sphi 0, %s19
      %p16 = scmp.ge.s32.totalorder %s15, 4
      %s25 = sphi 0, %s27
      %s28 = sphi 0, %s25
      %s29 = sphi 0, %s28
      %s45 = sphi 0, %s29
      %s51 = sphi 0, %s53
      %s54 = sphi 0, %s51
      %s55 = sphi 0, %s54
      %s71 = sphi 0, %s55
      %s75 = sphi 0, %s75
      %s77 = sphi 0, %s75
      %s78 = sphi 0, %s77
      %s92 = sphi 0, %s78
      %s98 = sphi 0, %s100
      %s101 = sphi 0, %s98
      %s102 = sphi 0, %s101
      %s118 = sphi 0, %s102
    $region4: #{tpu_custom_call.1} parent=1 // loop_header_branch
      %18 = sbr.rel (%p16) target = $region8
    $region5: #{tpu_custom_call.1} parent=1 // loop_body
      %s20 = ssub.s32 %s15, 1
      %s21 = ssub.s32 %s15, 2
      %s22 = sadd.s32 %s15, 1
      %s23 = ssub.s32 %s15, %s22
      %p24 = scmp.eq.s32.totalorder %s23, 0
      %s26 = sadd.s32 %s25, 1
      %s27 = scalar_select %p24, %s25, %s26
      %p30 = pneg %p24
      %p31 = scmp.eq.s32.totalorder %s15, 1
      %p32 = por %p30, %p31
      %p33 = scmp.ne.s32.totalorder %s25, %s28
      %p34 = scmp.eq.s32.totalorder %s15, 0
      %p35 = por %p33, %p34
      %p36 = scmp.ne.s32.totalorder %s25, %s28
      %p37 = scmp.eq.s32.totalorder %s20, 1
      %p38 = por %p36, %p37
      %p39 = scmp.ne.s32.totalorder %s28, %s29
      %p40 = scmp.eq.s32.totalorder %s20, 0
      %p41 = por %p39, %p40
      %p42 = scmp.ne.s32.totalorder %s28, %s29
      %p43 = scmp.eq.s32.totalorder %s21, 1
      %p44 = por %p42, %p43
      %p46 = scmp.ne.s32.totalorder %s29, %s45
      %p47 = scmp.eq.s32.totalorder %s21, 0
      %p48 = por %p46, %p47
      %s49 = ssub.s32 %s15, %s22
      %p50 = scmp.eq.s32.totalorder %s49, 0
      %s52 = sadd.s32 %s51, 1
      %s53 = scalar_select %p50, %s51, %s52
      %p56 = pneg %p50
      %p57 = scmp.eq.s32.totalorder %s15, 1
      %p58 = por %p56, %p57
      %p59 = scmp.ne.s32.totalorder %s51, %s54
      %p60 = scmp.eq.s32.totalorder %s15, 0
      %p61 = por %p59, %p60
      %p62 = scmp.ne.s32.totalorder %s51, %s54
      %p63 = scmp.eq.s32.totalorder %s20, 1
      %p64 = por %p62, %p63
      %p65 = scmp.ne.s32.totalorder %s54, %s55
      %p66 = scmp.eq.s32.totalorder %s20, 0
      %p67 = por %p65, %p66
      %p68 = scmp.ne.s32.totalorder %s54, %s55
      %p69 = scmp.eq.s32.totalorder %s21, 1
      %p70 = por %p68, %p69
      %p72 = scmp.ne.s32.totalorder %s55, %s71
      %p73 = scmp.eq.s32.totalorder %s21, 0
      %p74 = por %p72, %p73
      %s76 = sadd.s32 %s75, 1
      %p79 = scmp.eq.s32.totalorder %s15, 1
      %p80 = scmp.ne.s32.totalorder %s75, %s77
      %p81 = scmp.eq.s32.totalorder %s15, 0
      %p82 = por %p80, %p81
      %p83 = scmp.ne.s32.totalorder %s75, %s77
      %p84 = scmp.eq.s32.totalorder %s20, 1
      %p85 = por %p83, %p84
      %p86 = scmp.ne.s32.totalorder %s77, %s78
      %p87 = scmp.eq.s32.totalorder %s20, 0
      %p88 = por %p86, %p87
      %p89 = scmp.ne.s32.totalorder %s77, %s78
      %p90 = scmp.eq.s32.totalorder %s21, 1
      %p91 = por %p89, %p90
      %p93 = scmp.ne.s32.totalorder %s78, %s92
      %p94 = scmp.eq.s32.totalorder %s21, 0
      %p95 = por %p93, %p94
      %s96 = ssub.s32 %s15, %s22
      %p97 = scmp.eq.s32.totalorder %s96, 0
      %s99 = sadd.s32 %s98, 1
      %s100 = scalar_select %p97, %s98, %s99
      %p103 = pneg %p97
      %p104 = scmp.eq.s32.totalorder %s15, 1
      %p105 = por %p103, %p104
      %p106 = scmp.ne.s32.totalorder %s98, %s101
      %p107 = scmp.eq.s32.totalorder %s15, 0
      %p108 = por %p106, %p107
      %p109 = scmp.ne.s32.totalorder %s98, %s101
      %p110 = scmp.eq.s32.totalorder %s20, 1
      %p111 = por %p109, %p110
      %p112 = scmp.ne.s32.totalorder %s101, %s102
      %p113 = scmp.eq.s32.totalorder %s20, 0
      %p114 = por %p112, %p113
      %p115 = scmp.ne.s32.totalorder %s101, %s102
      %p116 = scmp.eq.s32.totalorder %s21, 1
      %p117 = por %p115, %p116
      %p119 = scmp.ne.s32.totalorder %s102, %s118
      %p120 = scmp.eq.s32.totalorder %s21, 0
      %p121 = por %p119, %p120
      %p122 = scmp.le.s32.totalorder 1, %s15
      %p123 = scmp.lt.s32.totalorder %s15, 3
      %p124 = pnand %p122, %p123
      %p125 = pneg %p124
      // Predicated region
      $region9: #{tpu_custom_call.1} parent=5 // pred_check
        _
      $region10: #{tpu_custom_call.1} parent=5 // pred_check_branch
        %127 = sbr.rel (%p124) target = $region12
      $region11: #{tpu_custom_call.1} parent=5 // pred_region
        %s128 = ssub.s32 %s15, 1
        // Predicated region
        $region13: #{tpu_custom_call.1} parent=11 // pred_check
          %p129 = pneg %p88
        $region14: #{tpu_custom_call.1} parent=11 // pred_check_branch
          %131 = sbr.rel (%p129) target = $region16
        $region15: #{tpu_custom_call.1} parent=11 // pred_region
          _
        $region16: #{tpu_custom_call.1} parent=11 // pred_fallthru
          _
      $region12: #{tpu_custom_call.1} parent=5 // pred_fallthru
        _
      %p132 = scmp.lt.s32.totalorder %s15, 2
      // Predicated region
      $region17: #{tpu_custom_call.1} parent=5 // pred_check
        %p133 = pneg %p132
      $region18: #{tpu_custom_call.1} parent=5 // pred_check_branch
        %135 = sbr.rel (%p133) target = $region20
      $region19: #{tpu_custom_call.1} parent=5 // pred_region
        // Predicated region
        $region21: #{tpu_custom_call.1} parent=19 // pred_check
          %p136 = pneg %p35
        $region22: #{tpu_custom_call.1} parent=19 // pred_check_branch
          %138 = sbr.rel (%p136) target = $region24
        $region23: #{tpu_custom_call.1} parent=19 // pred_region
          %p139 = scmp.lt.s32.totalorder %s15, 1
          %s140 = scalar_select %p139, %s15, 1
          %s141 = smul.addr %s140, 8
          %s142 = scalar_lea.vmem %s0, %s141
        $region24: #{tpu_custom_call.1} parent=19 // pred_fallthru
          _
        // Predicated region
        $region25: #{tpu_custom_call.1} parent=19 // pred_check
          %p143 = pneg %p61
        $region26: #{tpu_custom_call.1} parent=19 // pred_check_branch
          %145 = sbr.rel (%p143) target = $region28
        $region27: #{tpu_custom_call.1} parent=19 // pred_region
          %s146 = sand.u32 %s51, 1
          %s147 = scalar_lea.sflag [#allocation4], %s146
          %s148 = sand.u32 %s51, 1
          %s149 = smul.addr %s148, 64
          %s150 = scalar_lea.vmem [#allocation3], %s149
          %s151 = smul.u32 8, %s15
          %s153 = ssub.s32 1024, 1024
          %154 = vsyncadd %s147, %s153
          %s155 = smul.addr %s151, 128
          %s156 = scalar_lea.hbm %s1, %s155
          %s157 = sshll.u32 %s150, 4
          %s158 = int_to_ptr.vmem [resolvable:$true] %s157
          %163 = dma.hbm_to_vmem [thread:$0]  %s156, 1024, %s158, %s147, 128, 128, 8
        $region28: #{tpu_custom_call.1} parent=19 // pred_fallthru
          _
      $region20: #{tpu_custom_call.1} parent=5 // pred_fallthru
        _
      %p164 = scmp.le.s32.totalorder 1, %s15
      %p165 = scmp.lt.s32.totalorder %s15, 3
      %p166 = pnand %p164, %p165
      %p167 = pneg %p166
      // Predicated region
      $region29: #{tpu_custom_call.1} parent=5 // pred_check
        _
      $region30: #{tpu_custom_call.1} parent=5 // pred_check_branch
        %169 = sbr.rel (%p166) target = $region32
      $region31: #{tpu_custom_call.1} parent=5 // pred_region
        %s170 = ssub.s32 %s15, 1
        %s171 = sand.u32 %s54, 1
        %s172 = scalar_lea.sflag [#allocation4], %s171
        %s173 = sand.u32 %s54, 1
        %s174 = smul.addr %s173, 64
        %s175 = scalar_lea.vmem [#allocation3], %s174
        // Predicated region
        $region33: #{tpu_custom_call.1} parent=31 // pred_check
          %p176 = pneg %p67
        $region34: #{tpu_custom_call.1} parent=31 // pred_check_branch
          %178 = sbr.rel (%p176) target = $region36
        $region35: #{tpu_custom_call.1} parent=31 // pred_region
          %179 = dma.done %s172, 1024
        $region36: #{tpu_custom_call.1} parent=31 // pred_fallthru
          _
        %p180 = scmp.lt.s32.totalorder %s20, 1
        %s181 = scalar_select %p180, %s20, 1
        %s182 = smul.addr %s181, 8
        %s183 = scalar_lea.vmem %s0, %s182
        %p184 = pneg %p41
        %p185 = pneg %p38
        %s186 = sand.u32 %s54, 1
        %s187 = scalar_lea.sflag [#allocation4], %s186
        %s188 = sand.u32 %s54, 1
        %s189 = smul.addr %s188, 64
        %s190 = scalar_lea.vmem [#allocation3], %s189
        %p191 = pneg %p67
        %p192 = pneg %p64
        %p193 = pneg %p88
        %p194 = pneg %p85
        %p195 = pneg %p114
        %p196 = pneg %p111
        %s197 = sand.u32 %s101, 1
        %s198 = scalar_lea.sflag [#allocation5], %s197
        %s199 = sand.u32 %s101, 1
        %s200 = smul.addr %s199, 8
        %s201 = scalar_lea.vmem [#allocation6], %s200
        %p202 = scmp.lt.s32.totalorder %s20, 1
        %s203 = scalar_select %p202, %s20, 1
        %s204 = smul.addr %s203, 8
        %s205 = scalar_lea.vmem %s0, %s204
        %s206 = smul.u32 8, %s20
        %v207 = vld [vmem:[%s175] sm:$0xff]
        %v208 = vld [vmem:[%s175 + $0x8] sm:$0xff]
        %v209 = vld [vmem:[%s175 + $0x10] sm:$0xff]
        %v210 = vld [vmem:[%s175 + $0x18] sm:$0xff]
        %v211 = vld [vmem:[%s175 + $0x20] sm:$0xff]
        %v212 = vld [vmem:[%s175 + $0x28] sm:$0xff]
        %v213 = vld [vmem:[%s175 + $0x30] sm:$0xff]
        %v214 = vld [vmem:[%s175 + $0x38] sm:$0xff]
        %v215 = vld [vmem:[%s205] sm:$0xff]
        %v216 = vlaneseq
        %v217 = vshrl.u32 %v216, 7
        %v218 = vcombine.high %v215, %v215
        %v220 = vunpack.c.l.s4 1966171168
        %v221 = vunpack.c.0.s8 %v220
        %v222 = vlaneseq
        %v223 = vshrl.u32 %v222, 7
        %v224 = vsub.s32 %v221, %v223
        %v225 = vrot.slane %v215, %v224
        %v227 = vunpack.c.l.s4 1966171168
        %v228 = vunpack.c.0.s8 %v227
        %v229 = vlaneseq
        %v230 = vshrl.u32 %v229, 7
        %v231 = vsub.s32 %v228, %v230
        %v232 = vrot.slane %v218, %v231
        %v233 = vcombine.high %v225, %v225
        %v234 = vcombine.high %v232, %v232
        %v236 = vunpack.c.l.s4 1966171168
        %v237 = vunpack.c.0.s8 %v236
        %v238 = vlaneseq
        %v239 = vshrl.u32 %v238, 7
        %v240 = vsub.s32 %v237, %v239
        %v241 = vrot.slane %v225, %v240
        %v243 = vunpack.c.l.s4 1966171168
        %v244 = vunpack.c.0.s8 %v243
        %v245 = vlaneseq
        %v246 = vshrl.u32 %v245, 7
        %v247 = vsub.s32 %v244, %v246
        %v248 = vrot.slane %v232, %v247
        %v250 = vunpack.c.l.s4 1966171168
        %v251 = vunpack.c.0.s8 %v250
        %v252 = vlaneseq
        %v253 = vshrl.u32 %v252, 7
        %v254 = vsub.s32 %v251, %v253
        %v255 = vrot.slane %v233, %v254
        %v257 = vunpack.c.l.s4 1966171168
        %v258 = vunpack.c.0.s8 %v257
        %v259 = vlaneseq
        %v260 = vshrl.u32 %v259, 7
        %v261 = vsub.s32 %v258, %v260
        %v262 = vrot.slane %v234, %v261
        %v263 = vcombine.high %v241, %v241
        %v264 = vcombine.high %v248, %v248
        %v265 = vcombine.high %v255, %v255
        %v266 = vcombine.high %v262, %v262
        %v267 = vlaneseq
        %v268 = vshrl.u32 %v267, 7
        %v269 = vsub.s32 0, %v268
        %v270 = vrot.slane %v241, %v269
        %v271 = vlaneseq
        %v272 = vshrl.u32 %v271, 7
        %v273 = vsub.s32 0, %v272
        %v274 = vrot.slane %v255, %v273
        %v275 = vlaneseq
        %v276 = vshrl.u32 %v275, 7
        %v277 = vsub.s32 0, %v276
        %v278 = vrot.slane %v263, %v277
        %v279 = vlaneseq
        %v280 = vshrl.u32 %v279, 7
        %v281 = vsub.s32 0, %v280
        %v282 = vrot.slane %v265, %v281
        %v283 = vlaneseq
        %v284 = vshrl.u32 %v283, 7
        %v285 = vsub.s32 0, %v284
        %v286 = vrot.slane %v248, %v285
        %v287 = vlaneseq
        %v288 = vshrl.u32 %v287, 7
        %v289 = vsub.s32 0, %v288
        %v290 = vrot.slane %v262, %v289
        %v291 = vlaneseq
        %v292 = vshrl.u32 %v291, 7
        %v293 = vsub.s32 0, %v292
        %v294 = vrot.slane %v264, %v293
        %v295 = vlaneseq
        %v296 = vshrl.u32 %v295, 7
        %v297 = vsub.s32 0, %v296
        %v298 = vrot.slane %v266, %v297
        %299 = vset.pattern.permute.xlu0 0
        %300 = vperm.xlu0 %299, %v270
        %v301 = vpop.permute.xlu0 %300
        %302 = vset.pattern.permute.xlu0 0
        %303 = vperm.xlu0 %302, %v274
        %v304 = vpop.permute.xlu0 %303
        %305 = vset.pattern.permute.xlu0 0
        %306 = vperm.xlu0 %305, %v278
        %v307 = vpop.permute.xlu0 %306
        %308 = vset.pattern.permute.xlu0 0
        %309 = vperm.xlu0 %308, %v282
        %v310 = vpop.permute.xlu0 %309
        %311 = vset.pattern.permute.xlu0 0
        %312 = vperm.xlu0 %311, %v286
        %v313 = vpop.permute.xlu0 %312
        %314 = vset.pattern.permute.xlu0 0
        %315 = vperm.xlu0 %314, %v290
        %v316 = vpop.permute.xlu0 %315
        %317 = vset.pattern.permute.xlu0 0
        %318 = vperm.xlu0 %317, %v294
        %v319 = vpop.permute.xlu0 %318
        %320 = vset.pattern.permute.xlu0 0
        %321 = vperm.xlu0 %320, %v298
        %v322 = vpop.permute.xlu0 %321
        %vm323 = vcmp.eq.s32.totalorder %v217, %v301
        %vm324 = vcmp.eq.s32.totalorder %v217, %v304
        %vm325 = vcmp.eq.s32.totalorder %v217, %v307
        %vm326 = vcmp.eq.s32.totalorder %v217, %v310
        %vm327 = vcmp.eq.s32.totalorder %v217, %v313
        %vm328 = vcmp.eq.s32.totalorder %v217, %v316
        %vm329 = vcmp.eq.s32.totalorder %v217, %v319
        %vm330 = vcmp.eq.s32.totalorder %v217, %v322
        %v331 = vsel %vm323, %v207, 0.0
        %v332 = vsel %vm324, %v208, 0.0
        %v333 = vsel %vm325, %v209, 0.0
        %v334 = vsel %vm326, %v210, 0.0
        %v335 = vsel %vm327, %v211, 0.0
        %v336 = vsel %vm328, %v212, 0.0
        %v337 = vsel %vm329, %v213, 0.0
        %v338 = vsel %vm330, %v214, 0.0
        %vm339 = vcmask 261120
        %v340 = vsel %vm339, %v331, 0.0
        %v341 = vrot.slane %v340, 4
        %v342 = vadd.f32 %v340, %v341
        %v343 = vrot.slane %v342, 2
        %v344 = vadd.f32 %v342, %v343
        %v345 = vrot.slane %v344, 1
        %v346 = vadd.f32 %v344, %v345
        %v347 = vsel %vm339, %v332, 0.0
        %v348 = vrot.slane %v347, 4
        %v349 = vadd.f32 %v347, %v348
        %v350 = vrot.slane %v349, 2
        %v351 = vadd.f32 %v349, %v350
        %v352 = vrot.slane %v351, 1
        %v353 = vadd.f32 %v351, %v352
        %v354 = vsel %vm339, %v333, 0.0
        %v355 = vrot.slane %v354, 4
        %v356 = vadd.f32 %v354, %v355
        %v357 = vrot.slane %v356, 2
        %v358 = vadd.f32 %v356, %v357
        %v359 = vrot.slane %v358, 1
        %v360 = vadd.f32 %v358, %v359
        %v361 = vsel %vm339, %v334, 0.0
        %v362 = vrot.slane %v361, 4
        %v363 = vadd.f32 %v361, %v362
        %v364 = vrot.slane %v363, 2
        %v365 = vadd.f32 %v363, %v364
        %v366 = vrot.slane %v365, 1
        %v367 = vadd.f32 %v365, %v366
        %v368 = vsel %vm339, %v335, 0.0
        %v369 = vrot.slane %v368, 4
        %v370 = vadd.f32 %v368, %v369
        %v371 = vrot.slane %v370, 2
        %v372 = vadd.f32 %v370, %v371
        %v373 = vrot.slane %v372, 1
        %v374 = vadd.f32 %v372, %v373
        %v375 = vsel %vm339, %v336, 0.0
        %v376 = vrot.slane %v375, 4
        %v377 = vadd.f32 %v375, %v376
        %v378 = vrot.slane %v377, 2
        %v379 = vadd.f32 %v377, %v378
        %v380 = vrot.slane %v379, 1
        %v381 = vadd.f32 %v379, %v380
        %v382 = vsel %vm339, %v337, 0.0
        %v383 = vrot.slane %v382, 4
        %v384 = vadd.f32 %v382, %v383
        %v385 = vrot.slane %v384, 2
        %v386 = vadd.f32 %v384, %v385
        %v387 = vrot.slane %v386, 1
        %v388 = vadd.f32 %v386, %v387
        %v389 = vsel %vm339, %v338, 0.0
        %v390 = vrot.slane %v389, 4
        %v391 = vadd.f32 %v389, %v390
        %v392 = vrot.slane %v391, 2
        %v393 = vadd.f32 %v391, %v392
        %v394 = vrot.slane %v393, 1
        %v395 = vadd.f32 %v393, %v394
        %v396 = vsel %vm339, %v207, 0.0
        %v397 = vrot.slane %v396, 4
        %v398 = vadd.f32 %v396, %v397
        %v399 = vrot.slane %v398, 2
        %v400 = vadd.f32 %v398, %v399
        %v401 = vrot.slane %v400, 1
        %v402 = vadd.f32 %v400, %v401
        %v403 = vsel %vm339, %v208, 0.0
        %v404 = vrot.slane %v403, 4
        %v405 = vadd.f32 %v403, %v404
        %v406 = vrot.slane %v405, 2
        %v407 = vadd.f32 %v405, %v406
        %v408 = vrot.slane %v407, 1
        %v409 = vadd.f32 %v407, %v408
        %v410 = vsel %vm339, %v209, 0.0
        %v411 = vrot.slane %v410, 4
        %v412 = vadd.f32 %v410, %v411
        %v413 = vrot.slane %v412, 2
        %v414 = vadd.f32 %v412, %v413
        %v415 = vrot.slane %v414, 1
        %v416 = vadd.f32 %v414, %v415
        %v417 = vsel %vm339, %v210, 0.0
        %v418 = vrot.slane %v417, 4
        %v419 = vadd.f32 %v417, %v418
        %v420 = vrot.slane %v419, 2
        %v421 = vadd.f32 %v419, %v420
        %v422 = vrot.slane %v421, 1
        %v423 = vadd.f32 %v421, %v422
        %v424 = vsel %vm339, %v211, 0.0
        %v425 = vrot.slane %v424, 4
        %v426 = vadd.f32 %v424, %v425
        %v427 = vrot.slane %v426, 2
        %v428 = vadd.f32 %v426, %v427
        %v429 = vrot.slane %v428, 1
        %v430 = vadd.f32 %v428, %v429
        %v431 = vsel %vm339, %v212, 0.0
        %v432 = vrot.slane %v431, 4
        %v433 = vadd.f32 %v431, %v432
        %v434 = vrot.slane %v433, 2
        %v435 = vadd.f32 %v433, %v434
        %v436 = vrot.slane %v435, 1
        %v437 = vadd.f32 %v435, %v436
        %v438 = vsel %vm339, %v213, 0.0
        %v439 = vrot.slane %v438, 4
        %v440 = vadd.f32 %v438, %v439
        %v441 = vrot.slane %v440, 2
        %v442 = vadd.f32 %v440, %v441
        %v443 = vrot.slane %v442, 1
        %v444 = vadd.f32 %v442, %v443
        %v445 = vsel %vm339, %v214, 0.0
        %v446 = vrot.slane %v445, 4
        %v447 = vadd.f32 %v445, %v446
        %v448 = vrot.slane %v447, 2
        %v449 = vadd.f32 %v447, %v448
        %v450 = vrot.slane %v449, 1
        %v451 = vadd.f32 %v449, %v450
        %v452 = vrcp.pop 8.0
        %v453 = vmul.f32 %v402, %v452
        %v454 = vmul.f32 %v409, %v452
        %v455 = vmul.f32 %v416, %v452
        %v456 = vmul.f32 %v423, %v452
        %v457 = vmul.f32 %v430, %v452
        %v458 = vmul.f32 %v437, %v452
        %v459 = vmul.f32 %v444, %v452
        %v460 = vmul.f32 %v451, %v452
        %vm469 = vcmask 1041409
        %v470 = vsel %vm469, %v353, %v346
        %vm471 = vcmask 1042434
        %v472 = vsel %vm471, %v360, %v470
        %vm473 = vcmask 1043459
        %v474 = vsel %vm473, %v367, %v472
        %vm475 = vcmask 1044484
        %v476 = vsel %vm475, %v374, %v474
        %vm477 = vcmask 1045509
        %v478 = vsel %vm477, %v381, %v476
        %vm479 = vcmask 1046534
        %v480 = vsel %vm479, %v388, %v478
        %vm481 = vcmask 1047559
        %v482 = vsel %vm481, %v395, %v480
        %484 = vst.msk [vmem:[#allocation2] sm:$0xff] %vm339, %v482
        %v493 = vsel %vm469, %v454, %v453
        %v494 = vsel %vm471, %v455, %v493
        %v495 = vsel %vm473, %v456, %v494
        %v496 = vsel %vm475, %v457, %v495
        %v497 = vsel %vm477, %v458, %v496
        %v498 = vsel %vm479, %v459, %v497
        %v499 = vsel %vm481, %v460, %v498
        %500 = vrot.lane.b32.xlu0 %v499, 32
        %v501 = vpop.permute.xlu0 %500
        %vm503 = vcmask 523520
        %504 = vst.msk [vmem:[#allocation2] sm:$0xff] %vm503, %v501
        %v505 = vld [vmem:[#allocation2] sm:$0xff]
        %v506 = vld [vmem:[%s2] sm:$0xff]
        %v507 = vld [vmem:[%s2 + $0x8] sm:$0xff]
        %v508 = vld [vmem:[%s2 + $0x10] sm:$0xff]
        %v509 = vld [vmem:[%s2 + $0x18] sm:$0xff]
        %v510 = vld [vmem:[%s2 + $0x20] sm:$0xff]
        %v511 = vld [vmem:[%s2 + $0x28] sm:$0xff]
        %v512 = vld [vmem:[%s2 + $0x30] sm:$0xff]
        %v513 = vld [vmem:[%s2 + $0x38] sm:$0xff]
        %vm514 = vcmask 523264
        %v516 = vsel %vm514, %v505, 0
        %518 = vmatprep.subr.mxu0 0.0
        %519 = vmatpush1.msra.mxu0 0.0
        %520 = vmatprep.subr.mxu0 0.0
        %521 = vmatpush1.msra.mxu0 0.0
        %522 = vmatprep.subr.mxu0 0.0
        %523 = vmatpush1.msra.mxu0 0.0
        %524 = vmatprep.subr.mxu0 0.0
        %525 = vmatpush1.msra.mxu0 0.0
        %526 = vmatprep.subr.mxu0 0.0
        %527 = vmatpush1.msra.mxu0 0.0
        %528 = vmatprep.subr.mxu0 0.0
        %529 = vmatpush1.msra.mxu0 0.0
        %530 = vmatprep.subr.mxu0 0.0
        %531 = vmatpush1.msra.mxu0 0.0
        %532 = vmatprep.subr.mxu0 0.0
        %533 = vmatpush1.msra.mxu0 0.0
        %534 = vmatprep.subr.mxu0 0.0
        %535 = vmatpush1.msra.mxu0 %v513
        %536 = vmatprep.subr.mxu0 0.0
        %537 = vmatpush1.msra.mxu0 %v512
        %538 = vmatprep.subr.mxu0 0.0
        %539 = vmatpush1.msra.mxu0 %v511
        %540 = vmatprep.subr.mxu0 0.0
        %541 = vmatpush1.msra.mxu0 %v510
        %542 = vmatprep.subr.mxu0 0.0
        %543 = vmatpush1.msra.mxu0 %v509
        %544 = vmatprep.subr.mxu0 0.0
        %545 = vmatpush1.msra.mxu0 %v508
        %546 = vmatprep.subr.mxu0 0.0
        %547 = vmatpush1.msra.mxu0 %v507
        %548 = vmatprep.subr.mxu0 0.0
        %549 = vmatpush1.msra.mxu0 %v506
        %550 = vmatprep.subr.mxu0 0.0
        %551 = vmatpush2.msra.mxu0 0.0
        %552 = vmatprep.subr.mxu0 0.0
        %553 = vmatpush2.msra.mxu0 0.0
        %554 = vmatprep.subr.mxu0 0.0
        %555 = vmatpush2.msra.mxu0 0.0
        %556 = vmatprep.subr.mxu0 0.0
        %557 = vmatpush2.msra.mxu0 0.0
        %558 = vmatprep.subr.mxu0 0.0
        %559 = vmatpush2.msra.mxu0 0.0
        %560 = vmatprep.subr.mxu0 0.0
        %561 = vmatpush2.msra.mxu0 0.0
        %562 = vmatprep.subr.mxu0 0.0
        %563 = vmatpush2.msra.mxu0 0.0
        %564 = vmatprep.subr.mxu0 0.0
        %565 = vmatpush2.msra.mxu0 0.0
        %566 = vmatprep.subr.mxu0 0.0
        %567 = vmatpush2.msra.mxu0 0.0
        %568 = vmatprep.subr.mxu0 0.0
        %569 = vmatpush2.msra.mxu0 0.0
        %570 = vmatprep.subr.mxu0 0.0
        %571 = vmatpush2.msra.mxu0 0.0
        %572 = vmatprep.subr.mxu0 0.0
        %573 = vmatpush2.msra.mxu0 0.0
        %574 = vmatprep.subr.mxu0 0.0
        %575 = vmatpush2.msra.mxu0 0.0
        %576 = vmatprep.subr.mxu0 0.0
        %577 = vmatpush2.msra.mxu0 0.0
        %578 = vmatprep.subr.mxu0 0.0
        %579 = vmatpush2.msra.mxu0 0.0
        %580 = vmatprep.subr.mxu0 0.0
        %581 = vmatpush2.msra.mxu0 0.0
        %582 = vmatprep.mubr.f32.mxu0 0.0
        %583 = vmatmul.mubr.f32.gmra.mxu0 %v516
        %v584 = vpop.f32.mrf.mxu0
        %v585 = vadd.f32 0.0, %v584
        %v586 = vpop.f32.mrf.mxu0
        %587 = vdwg.mxu0
        %588 = vst.msk [vmem:[%s201] sm:$0xff] %vm339, %v585
        %s589 = sand.u32 %s101, 1
        %s590 = scalar_lea.sflag [#allocation5], %s589
        %s591 = sand.u32 %s101, 1
        %s592 = smul.addr %s591, 8
        %s593 = scalar_lea.vmem [#allocation6], %s592
        // Predicated region
        $region37: #{tpu_custom_call.1} parent=31 // pred_check
          %p594 = pneg %p111
        $region38: #{tpu_custom_call.1} parent=31 // pred_check_branch
          %596 = sbr.rel (%p594) target = $region40
        $region39: #{tpu_custom_call.1} parent=31 // pred_region
          %s598 = ssub.s32 128, 128
          %599 = vsyncadd %s590, %s598
          %s600 = smul.addr %s20, 128
          %s601 = scalar_lea.hbm %s3, %s600
          %s603 = sshll.u32 %s593, 4
          %s604 = int_to_ptr.vmem [resolvable:$true] %s603
          %606 = dma.vmem_to_hbm [thread:$0]  %s604, 128, %s601, %s590
        $region40: #{tpu_custom_call.1} parent=31 // pred_fallthru
          _
      $region32: #{tpu_custom_call.1} parent=5 // pred_fallthru
        _
      %p607 = scmp.le.s32.totalorder 2, %s15
      // Predicated region
      $region41: #{tpu_custom_call.1} parent=5 // pred_check
        %p608 = pneg %p607
      $region42: #{tpu_custom_call.1} parent=5 // pred_check_branch
        %610 = sbr.rel (%p608) target = $region44
      $region43: #{tpu_custom_call.1} parent=5 // pred_region
        %s611 = ssub.s32 %s15, 2
        // Predicated region
        $region45: #{tpu_custom_call.1} parent=43 // pred_check
          %p612 = pneg %p117
        $region46: #{tpu_custom_call.1} parent=43 // pred_check_branch
          %614 = sbr.rel (%p612) target = $region48
        $region47: #{tpu_custom_call.1} parent=43 // pred_region
          %s615 = sand.u32 %s102, 1
          %s616 = scalar_lea.sflag [#allocation5], %s615
          %s617 = sand.u32 %s102, 1
          %s618 = smul.addr %s617, 8
          %s619 = scalar_lea.vmem [#allocation6], %s618
          %620 = dma.done %s616, 128
        $region48: #{tpu_custom_call.1} parent=43 // pred_fallthru
          _
      $region44: #{tpu_custom_call.1} parent=5 // pred_fallthru
        _
    $region6: #{tpu_custom_call.1} parent=1 // loop_footer
      %s19 = sadd.s32 1, %s15
    $region7: #{tpu_custom_call.1} parent=1 // loop_footer_branch
      %14 = sbr.rel target = $region3
    $region8: #{tpu_custom_call.1} parent=1 // loop_exit
      _
    %621 = vsyncpa [#allocation4], 1
    %s622 = scalar_lea.sflag [#allocation4], 1
    %623 = vsyncpa %s622, 1
    %624 = vsyncpa [#allocation5], 1
    %s625 = scalar_lea.sflag [#allocation5], 1
    %626 = vsyncpa %s625, 1

</llo_original>
